<compile_context>
chip_gen: v7x
topology: tpu7x:2x2x1
jax: 0.10.0
libtpu: 0.0.40
codegen_flags: <defaults>
</compile_context>

<pallas_src>
import numpy as np
import jax
import jax.numpy as jnp
from jax.experimental import pallas as pl
from jax.experimental.pallas import tpu as pltpu


def _round_up(n: int, m: int) -> int:
    return ((n + m - 1) // m) * m


# Below this input width, layer 1 is computed as broadcast-FMAs on the VPU
# (no MXU matmul, no padding of x needed at all).
_SMALL_IN = 16


def _make_mlp_kernel(n_layers, act, d_in, d_out, pdims, small_in):
    # NOTE: any act string other than 'tanh' falls back to relu (matches the
    # torch module's behaviour).
    act_fn = jnp.tanh if act == "tanh" else (lambda h: jnp.maximum(h, 0.0))

    def kernel(x_ref, b_ref, *refs):
        out_ref = refs[-1]
        w_refs = refs[:-1]

        # ---------------- layer 1 ----------------
        b1 = b_ref[0:1, :pdims[1]].astype(jnp.float32)
        if small_in:
            # d_in is tiny: sum of outer products on the VPU, exact f32.
            x = x_ref[...].astype(jnp.float32)            # (tm, d_in) true width
            w1 = w_refs[0][...].astype(jnp.float32)       # (d_in, N1p)
            h = x[:, 0:1] * w1[0:1, :]
            for k in range(1, d_in):
                h = h + x[:, k:k + 1] * w1[k:k + 1, :]
            h = h + b1
        else:
            # d_in padded to a 128 multiple in the wrapper -> aligned MXU dot.
            h = jnp.dot(x_ref[...].astype(jnp.bfloat16), w_refs[0][...],
                        preferred_element_type=jnp.float32) + b1
        h = act_fn(h)

        # ---------------- hidden layers ----------------
        for i in range(1, n_layers - 1):
            b = b_ref[i:i + 1, :pdims[i + 1]].astype(jnp.float32)
            h = jnp.dot(h.astype(jnp.bfloat16), w_refs[i][...],
                        preferred_element_type=jnp.float32) + b
            h = act_fn(h)

        # ---------------- final layer (no activation) ----------------
        bl = b_ref[n_layers - 1:n_layers, :pdims[n_layers]].astype(jnp.float32)
        y = jnp.dot(h.astype(jnp.bfloat16), w_refs[n_layers - 1][...],
                    preferred_element_type=jnp.float32) + bl
        if d_out != pdims[n_layers]:
            y = y[:, :d_out]                 # fused narrow slice before the store
        out_ref[...] = y.astype(out_ref.dtype)

    return kernel


def prepare_mlp_params(params, compute_dtype=jnp.bfloat16):
    """Pad / pack / cast the raw (W[in,out], b[out]) list ONCE.

    Done outside the per-call hot path so a forward call launches no XLA pad
    ops.  Weights are cast to bf16 for native MXU throughput (accumulation in
    the kernel stays f32); biases are packed into one (n_layers, maxN) f32
    array.
    """
    dims = [params[0][0].shape[0]] + [w.shape[1] for w, _ in params]
    n_layers = len(params)
    small_in = dims[0] <= _SMALL_IN
    pdims = [dims[0] if small_in else _round_up(dims[0], 128)]
    pdims += [_round_up(d, 128) for d in dims[1:]]
    max_n = max(pdims[1:])

    weights = []
    bias = jnp.zeros((n_layers, max_n), jnp.float32)
    for i, (w, b) in enumerate(params):
        din, dout = w.shape
        wp = jnp.zeros((pdims[i], pdims[i + 1]), compute_dtype)
        wp = wp.at[:din, :dout].set(w.astype(compute_dtype))
        weights.append(wp)
        bias = bias.at[i, :dout].set(b.astype(jnp.float32))

    return {"weights": weights, "bias": bias, "dims": dims,
            "pdims": pdims, "small_in": small_in}


def mlp_forward(x, prep, act="relu", *, block_batch=1024, interpret=False):
    """Fused MLP forward.  `prep` comes from prepare_mlp_params(params)."""
    B, d_in = x.shape
    dims, pdims = prep["dims"], prep["pdims"]
    small_in = prep["small_in"]
    n_layers = len(prep["weights"])
    d_out = dims[-1]
    assert d_in == dims[0], "input width does not match prepared params"

    # Batch tiling: multiple-of-8 tiles near a divisor of B (minimal zero-row
    # padding) and >= 2 grid steps whenever possible (v7x megacore).
    b8 = _round_up(B, 8)
    nt = pl.cdiv(b8, block_batch)
    if nt < 2 and b8 >= 16:
        nt = 2
    tm = _round_up(pl.cdiv(b8, nt), 8)
    bp = tm * nt

    d_in_k = d_in if small_in else pdims[0]
    if bp != B or d_in_k != d_in:
        x_in = jnp.zeros((bp, d_in_k), x.dtype).at[:B, :d_in].set(x)
    else:
        x_in = x                                  # no wrapper-side copies at all

    in_specs = [
        # Streaming input: true feature width (block == full array dim -> legal).
        pl.BlockSpec((tm, d_in_k), lambda i: (i, 0)),
        # Packed biases: full extent, constant index map -> VMEM resident.
        pl.BlockSpec(prep["bias"].shape, lambda i: (0, 0)),
    ]
    for w in prep["weights"]:
        # Full-extent weights, constant index map -> single fetch, VMEM resident.
        in_specs.append(pl.BlockSpec(w.shape, lambda i: (0, 0)))

    kernel = _make_mlp_kernel(n_layers, act, d_in, d_out, pdims, small_in)

    out = pl.pallas_call(
        kernel,
        grid=(nt,),
        in_specs=in_specs,
        # True-width output: block last dim == full array dim (d_out).
        out_specs=pl.BlockSpec((tm, d_out), lambda i: (i, 0)),
        out_shape=jax.ShapeDtypeStruct((bp, d_out), x.dtype),
        compiler_params=pltpu.CompilerParams(
            dimension_semantics=("parallel",),   # batch tiles independent
        ),
        interpret=interpret,
    )(x_in, prep["bias"], *prep["weights"])

    return out if bp == B else out[:B]


def build_mlp_params(key, input_dim, output_dim, hidden_layers):
    """Mirror `mlp.__init__`: layer1, [layer_ if big], layer2, layer3 (forward order).

    Weights are stored as (in_features, out_features) so the kernel computes
    x @ W + b == torch's x @ weight.T + bias.
    """
    h1, h2 = hidden_layers[0], hidden_layers[-1]
    big = len(hidden_layers) > 2
    shapes = [(input_dim, h1)]
    if big:
        shapes.append((h2, h2))          # layer_ (requires h1 == h2, as in torch)
    shapes += [(h1, h2), (h2, output_dim)]

    params = []
    for din, dout in shapes:
        key, kw, kb = jax.random.split(key, 3)
        bound = 1.0 / np.sqrt(din)
        w = jax.random.uniform(kw, (din, dout), jnp.float32, minval=-bound, maxval=bound)
        b = jax.random.uniform(kb, (dout,), jnp.float32, minval=-bound, maxval=bound)
        params.append((w, b))
    return params


def mlp_reference(x, params, act="relu"):
    """Pure numpy (f32) reference matching the torch forward."""
    h = np.asarray(x, np.float32)
    for i, (w, b) in enumerate(params):
        h = h @ np.asarray(w, np.float32) + np.asarray(b, np.float32)
        if i < len(params) - 1:
            h = np.tanh(h) if act == "tanh" else np.maximum(h, 0.0)
    return h


if __name__ == "__main__":
    key = jax.random.PRNGKey(0)

    # Config 1: mlp(4, 2, [32, 32],     act='relu') -> big == False (3 Linears)
    # Config 2: mlp(4, 2, [32, 32, 32], act='tanh') -> big == True  (4 Linears)
    for hidden, act in (([32, 32], "relu"), ([32, 32, 32], "tanh")):
        key, kx, kp = jax.random.split(key, 3)
        B, d_in, d_out = 64, 4, 2
        x = jax.random.normal(kx, (B, d_in), dtype=jnp.float32)
        params = build_mlp_params(kp, d_in, d_out, hidden)

        prep = prepare_mlp_params(params)          # one-time pad/pack/bf16 cast
        y = mlp_forward(x, prep, act=act)
        y = jax.block_until_ready(y)
        assert y.shape == (B, d_out)

        y_ref = mlp_reference(x, params, act=act)
        # bf16 weights/activations in the kernel -> slightly looser tolerance.
        np.testing.assert_allclose(np.asarray(y), y_ref, rtol=3e-2, atol=3e-2)

    print("KERNEL_OK")
</pallas_src>

<mosaic_0001>
module attributes {stable_mosaic.version = 11 : i64} {
  func.func @kernel(%arg0: i32, %arg1: memref<32x4xf32, #tpu.memory_space<vmem>>, %arg2: memref<3x128xf32, #tpu.memory_space<vmem>>, %arg3: memref<4x128xbf16, #tpu.memory_space<vmem>>, %arg4: memref<128x128xbf16, #tpu.memory_space<vmem>>, %arg5: memref<128x128xbf16, #tpu.memory_space<vmem>>, %arg6: memref<32x2xf32, #tpu.memory_space<vmem>>) attributes {dimension_semantics = [#tpu.dimension_semantics<parallel>], iteration_bounds = array<i64: 2>, scalar_prefetch = 0 : i64, scratch_operands = 0 : i64, tpu.core_type = #tpu.core_type<tc>, window_params = [{transform_indices = @transform_0, window_bounds = array<i64: 32, 4>}, {pipeline_mode = #tpu.pipeline_mode<synchronous>, transform_indices = @transform_1, window_bounds = array<i64: 3, 128>}, {pipeline_mode = #tpu.pipeline_mode<synchronous>, transform_indices = @transform_2, window_bounds = array<i64: 4, 128>}, {pipeline_mode = #tpu.pipeline_mode<synchronous>, transform_indices = @transform_3, window_bounds = array<i64: 128, 128>}, {pipeline_mode = #tpu.pipeline_mode<synchronous>, transform_indices = @transform_4, window_bounds = array<i64: 128, 128>}, {transform_indices = @transform_5, window_bounds = array<i64: 32, 2>}]} {
    %c0 = arith.constant 0 : index
    %c0_0 = arith.constant 0 : index
    %0 = vector.load %arg2[%c0, %c0_0] : memref<3x128xf32, #tpu.memory_space<vmem>>, vector<1x128xf32>
    %c0_1 = arith.constant 0 : index
    %c0_2 = arith.constant 0 : index
    %1 = vector.load %arg1[%c0_1, %c0_2] : memref<32x4xf32, #tpu.memory_space<vmem>>, vector<32x4xf32>
    %c0_3 = arith.constant 0 : index
    %c0_4 = arith.constant 0 : index
    %2 = vector.load %arg3[%c0_3, %c0_4] : memref<4x128xbf16, #tpu.memory_space<vmem>>, vector<4x128xbf16>
    %3 = arith.extf %2 : vector<4x128xbf16> to vector<4x128xf32>
    %4 = vector.extract_strided_slice %1 {offsets = [0, 0], sizes = [32, 1], strides = [1, 1]} : vector<32x4xf32> to vector<32x1xf32>
    %5 = vector.extract_strided_slice %3 {offsets = [0, 0], sizes = [1, 128], strides = [1, 1]} : vector<4x128xf32> to vector<1x128xf32>
    %6 = vector.broadcast %4 : vector<32x1xf32> to vector<32x128xf32>
    %7 = vector.broadcast %5 : vector<1x128xf32> to vector<32x128xf32>
    %8 = arith.mulf %6, %7 : vector<32x128xf32>
    %9 = vector.extract_strided_slice %1 {offsets = [0, 1], sizes = [32, 1], strides = [1, 1]} : vector<32x4xf32> to vector<32x1xf32>
    %10 = vector.extract_strided_slice %3 {offsets = [1, 0], sizes = [1, 128], strides = [1, 1]} : vector<4x128xf32> to vector<1x128xf32>
    %11 = vector.broadcast %9 : vector<32x1xf32> to vector<32x128xf32>
    %12 = vector.broadcast %10 : vector<1x128xf32> to vector<32x128xf32>
    %13 = arith.mulf %11, %12 : vector<32x128xf32>
    %14 = arith.addf %8, %13 : vector<32x128xf32>
    %15 = vector.extract_strided_slice %1 {offsets = [0, 2], sizes = [32, 1], strides = [1, 1]} : vector<32x4xf32> to vector<32x1xf32>
    %16 = vector.extract_strided_slice %3 {offsets = [2, 0], sizes = [1, 128], strides = [1, 1]} : vector<4x128xf32> to vector<1x128xf32>
    %17 = vector.broadcast %15 : vector<32x1xf32> to vector<32x128xf32>
    %18 = vector.broadcast %16 : vector<1x128xf32> to vector<32x128xf32>
    %19 = arith.mulf %17, %18 : vector<32x128xf32>
    %20 = arith.addf %14, %19 : vector<32x128xf32>
    %21 = vector.extract_strided_slice %1 {offsets = [0, 3], sizes = [32, 1], strides = [1, 1]} : vector<32x4xf32> to vector<32x1xf32>
    %22 = vector.extract_strided_slice %3 {offsets = [3, 0], sizes = [1, 128], strides = [1, 1]} : vector<4x128xf32> to vector<1x128xf32>
    %23 = vector.broadcast %21 : vector<32x1xf32> to vector<32x128xf32>
    %24 = vector.broadcast %22 : vector<1x128xf32> to vector<32x128xf32>
    %25 = arith.mulf %23, %24 : vector<32x128xf32>
    %26 = arith.addf %20, %25 : vector<32x128xf32>
    %27 = vector.broadcast %0 : vector<1x128xf32> to vector<32x128xf32>
    %28 = arith.addf %26, %27 : vector<32x128xf32>
    %cst = arith.constant 0.000000e+00 : f32
    %29 = vector.broadcast %cst : f32 to vector<32x128xf32>
    %30 = arith.maximumf %28, %29 : vector<32x128xf32>
    %c1 = arith.constant 1 : index
    %c0_5 = arith.constant 0 : index
    %31 = vector.load %arg2[%c1, %c0_5] : memref<3x128xf32, #tpu.memory_space<vmem>>, vector<1x128xf32>
    %32 = arith.truncf %30 : vector<32x128xf32> to vector<32x128xbf16>
    %c0_6 = arith.constant 0 : index
    %c0_7 = arith.constant 0 : index
    %33 = vector.load %arg4[%c0_6, %c0_7] : memref<128x128xbf16, #tpu.memory_space<vmem>>, vector<128x128xbf16>
    %cst_8 = arith.constant dense<0.000000e+00> : vector<32x128xf32>
    %34 = tpu.matmul %32, %33, %cst_8 {dimension_numbers = #tpu.dot_dimension_numbers<[1], [0], [0], [1], [0, 0, 1, 1], [], []>} : vector<32x128xbf16>, vector<128x128xbf16>, vector<32x128xf32> -> vector<32x128xf32>
    %35 = vector.broadcast %31 : vector<1x128xf32> to vector<32x128xf32>
    %36 = arith.addf %34, %35 : vector<32x128xf32>
    %cst_9 = arith.constant 0.000000e+00 : f32
    %37 = vector.broadcast %cst_9 : f32 to vector<32x128xf32>
    %38 = arith.maximumf %36, %37 : vector<32x128xf32>
    %c2 = arith.constant 2 : index
    %c0_10 = arith.constant 0 : index
    %39 = vector.load %arg2[%c2, %c0_10] : memref<3x128xf32, #tpu.memory_space<vmem>>, vector<1x128xf32>
    %40 = arith.truncf %38 : vector<32x128xf32> to vector<32x128xbf16>
    %c0_11 = arith.constant 0 : index
    %c0_12 = arith.constant 0 : index
    %41 = vector.load %arg5[%c0_11, %c0_12] : memref<128x128xbf16, #tpu.memory_space<vmem>>, vector<128x128xbf16>
    %cst_13 = arith.constant dense<0.000000e+00> : vector<32x128xf32>
    %42 = tpu.matmul %40, %41, %cst_13 {dimension_numbers = #tpu.dot_dimension_numbers<[1], [0], [0], [1], [0, 0, 1, 1], [], []>} : vector<32x128xbf16>, vector<128x128xbf16>, vector<32x128xf32> -> vector<32x128xf32>
    %43 = vector.broadcast %39 : vector<1x128xf32> to vector<32x128xf32>
    %44 = arith.addf %42, %43 : vector<32x128xf32>
    %45 = vector.extract_strided_slice %44 {offsets = [0, 0], sizes = [32, 2], strides = [1, 1]} : vector<32x128xf32> to vector<32x2xf32>
    %c0_14 = arith.constant 0 : index
    %c0_15 = arith.constant 0 : index
    %46 = vector.load %arg6[%c0_14, %c0_15] : memref<32x2xf32, #tpu.memory_space<vmem>>, vector<32x2xf32>
    tpu.vector_store %arg6[%c0_14, %c0_15], %45 {strides = array<i32>} : memref<32x2xf32, #tpu.memory_space<vmem>>, vector<32x2xf32>,
    return
  }
  func.func @transform_0(%arg0: i32) -> (i32, i32) {
    %c0_i32 = arith.constant 0 : i32
    %c0_i32_0 = arith.constant 0 : i32
    return %arg0, %c0_i32 : i32, i32
  }
  func.func @transform_1(%arg0: i32) -> (i32, i32) {
    %c0_i32 = arith.constant 0 : i32
    %c0_i32_0 = arith.constant 0 : i32
    %c0_i32_1 = arith.constant 0 : i32
    return %c0_i32, %c0_i32_0 : i32, i32
  }
  func.func @transform_2(%arg0: i32) -> (i32, i32) {
    %c0_i32 = arith.constant 0 : i32
    %c0_i32_0 = arith.constant 0 : i32
    %c0_i32_1 = arith.constant 0 : i32
    return %c0_i32, %c0_i32_0 : i32, i32
  }
  func.func @transform_3(%arg0: i32) -> (i32, i32) {
    %c0_i32 = arith.constant 0 : i32
    %c0_i32_0 = arith.constant 0 : i32
    %c0_i32_1 = arith.constant 0 : i32
    return %c0_i32, %c0_i32_0 : i32, i32
  }
  func.func @transform_4(%arg0: i32) -> (i32, i32) {
    %c0_i32 = arith.constant 0 : i32
    %c0_i32_0 = arith.constant 0 : i32
    %c0_i32_1 = arith.constant 0 : i32
    return %c0_i32, %c0_i32_0 : i32, i32
  }
  func.func @transform_5(%arg0: i32) -> (i32, i32) {
    %c0_i32 = arith.constant 0 : i32
    %c0_i32_0 = arith.constant 0 : i32
    return %arg0, %c0_i32 : i32, i32
  }
}

</mosaic_0001>

<llo_original>
// kernel: tpu_custom_call.1
$region0: #{tpu_custom_call.1}
  #allocation0 [shape = 'u32[]', space=smem, size = 0x4, offset = 0x4, fixed_abs, tag = 'smem constant byte address 0x4 - core index']
  #allocation1 [shape = 'u32[144,128]{1,0:T(1,128)}', space=vmem, size = 0x12000, scoped, tag = 'internal scratch']
  %s0 = inlined_call_operand.vmem [shape: f32[64,4], index: 0, kind: input, shape index: {}]
  %s1 = inlined_call_operand.vmem [shape: f32[3,128], index: 1, kind: input, shape index: {}]
  %s2 = inlined_call_operand.vmem [shape: bf16[4,128], index: 2, kind: input, shape index: {}]
  %s3 = inlined_call_operand.vmem [shape: bf16[128,128], index: 3, kind: input, shape index: {}]
  %s4 = inlined_call_operand.hbm [shape: bf16[128,128], index: 4, kind: input, shape index: {}]
  %s5 = inlined_call_operand.vmem [shape: f32[64,2], index: 5, kind: output, shape index: {}]
  %s6 = sld [smem:[#allocation0]]
  $region57: #{tpu_custom_call.1} parent=0
    _
  %s8 = ssub.s32 1, %s6
  %s9 = scalar_select 0, %s8, %s6
  $region1: #{tpu_custom_call.1} parent=0
    #allocation2 [shape = 'u8[32768]{0}', space=vmem, size = 0x8000, scoped, tag = 'input window, operand 4, single buffered']
    #allocation3 [shape = 's32[2]{0}', space=sflag, size = 0x8, scoped, tag = 'scoped memory for tpu_custom_call.1']
    %10 = vsyncpa [#allocation3], 0
    loop: start=0, step=1, limit=4
    $region2: #{tpu_custom_call.1} parent=1 // loop_pre_header
      _
    $region3: #{tpu_custom_call.1} parent=1 // loop_header
      %s12 = sphi 0, %s16
      %p13 = scmp.ge.s32.totalorder %s12, 4
      %s22 = sphi 0, %s24
      %s25 = sphi 0, %s22
      %s26 = sphi 0, %s25
      %s42 = sphi 0, %s26
      %s46 = sphi 0, %s46
      %s48 = sphi 0, %s46
      %s49 = sphi 0, %s48
      %s63 = sphi 0, %s49
      %s67 = sphi 0, %s67
      %s69 = sphi 0, %s67
      %s70 = sphi 0, %s69
      %s84 = sphi 0, %s70
      %s88 = sphi 0, %s88
      %s90 = sphi 0, %s88
      %s91 = sphi 0, %s90
      %s105 = sphi 0, %s91
      %s109 = sphi 0, %s109
      %s111 = sphi 0, %s109
      %s112 = sphi 0, %s111
      %s126 = sphi 0, %s112
      %s132 = sphi 0, %s134
      %s135 = sphi 0, %s132
      %s136 = sphi 0, %s135
      %s152 = sphi 0, %s136
    $region4: #{tpu_custom_call.1} parent=1 // loop_header_branch
      %15 = sbr.rel (%p13) target = $region8
    $region5: #{tpu_custom_call.1} parent=1 // loop_body
      %s17 = ssub.s32 %s12, 1
      %s18 = ssub.s32 %s12, 2
      %s19 = sadd.s32 %s12, 1
      %s20 = ssub.s32 %s12, %s19
      %p21 = scmp.eq.s32.totalorder %s20, 0
      %s23 = sadd.s32 %s22, 1
      %s24 = scalar_select %p21, %s22, %s23
      %p27 = pneg %p21
      %p28 = scmp.eq.s32.totalorder %s12, 1
      %p29 = por %p27, %p28
      %p30 = scmp.ne.s32.totalorder %s22, %s25
      %p31 = scmp.eq.s32.totalorder %s12, 0
      %p32 = por %p30, %p31
      %p33 = scmp.ne.s32.totalorder %s22, %s25
      %p34 = scmp.eq.s32.totalorder %s17, 1
      %p35 = por %p33, %p34
      %p36 = scmp.ne.s32.totalorder %s25, %s26
      %p37 = scmp.eq.s32.totalorder %s17, 0
      %p38 = por %p36, %p37
      %p39 = scmp.ne.s32.totalorder %s25, %s26
      %p40 = scmp.eq.s32.totalorder %s18, 1
      %p41 = por %p39, %p40
      %p43 = scmp.ne.s32.totalorder %s26, %s42
      %p44 = scmp.eq.s32.totalorder %s18, 0
      %p45 = por %p43, %p44
      %s47 = sadd.s32 %s46, 1
      %p50 = scmp.eq.s32.totalorder %s12, 1
      %p51 = scmp.ne.s32.totalorder %s46, %s48
      %p52 = scmp.eq.s32.totalorder %s12, 0
      %p53 = por %p51, %p52
      %p54 = scmp.ne.s32.totalorder %s46, %s48
      %p55 = scmp.eq.s32.totalorder %s17, 1
      %p56 = por %p54, %p55
      %p57 = scmp.ne.s32.totalorder %s48, %s49
      %p58 = scmp.eq.s32.totalorder %s17, 0
      %p59 = por %p57, %p58
      %p60 = scmp.ne.s32.totalorder %s48, %s49
      %p61 = scmp.eq.s32.totalorder %s18, 1
      %p62 = por %p60, %p61
      %p64 = scmp.ne.s32.totalorder %s49, %s63
      %p65 = scmp.eq.s32.totalorder %s18, 0
      %p66 = por %p64, %p65
      %s68 = sadd.s32 %s67, 1
      %p71 = scmp.eq.s32.totalorder %s12, 1
      %p72 = scmp.ne.s32.totalorder %s67, %s69
      %p73 = scmp.eq.s32.totalorder %s12, 0
      %p74 = por %p72, %p73
      %p75 = scmp.ne.s32.totalorder %s67, %s69
      %p76 = scmp.eq.s32.totalorder %s17, 1
      %p77 = por %p75, %p76
      %p78 = scmp.ne.s32.totalorder %s69, %s70
      %p79 = scmp.eq.s32.totalorder %s17, 0
      %p80 = por %p78, %p79
      %p81 = scmp.ne.s32.totalorder %s69, %s70
      %p82 = scmp.eq.s32.totalorder %s18, 1
      %p83 = por %p81, %p82
      %p85 = scmp.ne.s32.totalorder %s70, %s84
      %p86 = scmp.eq.s32.totalorder %s18, 0
      %p87 = por %p85, %p86
      %s89 = sadd.s32 %s88, 1
      %p92 = scmp.eq.s32.totalorder %s12, 1
      %p93 = scmp.ne.s32.totalorder %s88, %s90
      %p94 = scmp.eq.s32.totalorder %s12, 0
      %p95 = por %p93, %p94
      %p96 = scmp.ne.s32.totalorder %s88, %s90
      %p97 = scmp.eq.s32.totalorder %s17, 1
      %p98 = por %p96, %p97
      %p99 = scmp.ne.s32.totalorder %s90, %s91
      %p100 = scmp.eq.s32.totalorder %s17, 0
      %p101 = por %p99, %p100
      %p102 = scmp.ne.s32.totalorder %s90, %s91
      %p103 = scmp.eq.s32.totalorder %s18, 1
      %p104 = por %p102, %p103
      %p106 = scmp.ne.s32.totalorder %s91, %s105
      %p107 = scmp.eq.s32.totalorder %s18, 0
      %p108 = por %p106, %p107
      %s110 = sadd.s32 %s109, 1
      %p113 = scmp.eq.s32.totalorder %s12, 1
      %p114 = scmp.ne.s32.totalorder %s109, %s111
      %p115 = scmp.eq.s32.totalorder %s12, 0
      %p116 = por %p114, %p115
      %p117 = scmp.ne.s32.totalorder %s109, %s111
      %p118 = scmp.eq.s32.totalorder %s17, 1
      %p119 = por %p117, %p118
      %p120 = scmp.ne.s32.totalorder %s111, %s112
      %p121 = scmp.eq.s32.totalorder %s17, 0
      %p122 = por %p120, %p121
      %p123 = scmp.ne.s32.totalorder %s111, %s112
      %p124 = scmp.eq.s32.totalorder %s18, 1
      %p125 = por %p123, %p124
      %p127 = scmp.ne.s32.totalorder %s112, %s126
      %p128 = scmp.eq.s32.totalorder %s18, 0
      %p129 = por %p127, %p128
      %s130 = ssub.s32 %s12, %s19
      %p131 = scmp.eq.s32.totalorder %s130, 0
      %s133 = sadd.s32 %s132, 1
      %s134 = scalar_select %p131, %s132, %s133
      %p137 = pneg %p131
      %p138 = scmp.eq.s32.totalorder %s12, 1
      %p139 = por %p137, %p138
      %p140 = scmp.ne.s32.totalorder %s132, %s135
      %p141 = scmp.eq.s32.totalorder %s12, 0
      %p142 = por %p140, %p141
      %p143 = scmp.ne.s32.totalorder %s132, %s135
      %p144 = scmp.eq.s32.totalorder %s17, 1
      %p145 = por %p143, %p144
      %p146 = scmp.ne.s32.totalorder %s135, %s136
      %p147 = scmp.eq.s32.totalorder %s17, 0
      %p148 = por %p146, %p147
      %p149 = scmp.ne.s32.totalorder %s135, %s136
      %p150 = scmp.eq.s32.totalorder %s18, 1
      %p151 = por %p149, %p150
      %p153 = scmp.ne.s32.totalorder %s136, %s152
      %p154 = scmp.eq.s32.totalorder %s18, 0
      %p155 = por %p153, %p154
      %p156 = scmp.le.s32.totalorder 1, %s12
      %p157 = scmp.lt.s32.totalorder %s12, 3
      %p158 = pnand %p156, %p157
      %p159 = pneg %p158
      // Predicated region
      $region9: #{tpu_custom_call.1} parent=5 // pred_check
        _
      $region10: #{tpu_custom_call.1} parent=5 // pred_check_branch
        %161 = sbr.rel (%p158) target = $region12
      $region11: #{tpu_custom_call.1} parent=5 // pred_region
        %s162 = ssub.s32 %s12, 1
        // Predicated region
        $region13: #{tpu_custom_call.1} parent=11 // pred_check
          %p163 = pneg %p59
        $region14: #{tpu_custom_call.1} parent=11 // pred_check_branch
          %165 = sbr.rel (%p163) target = $region16
        $region15: #{tpu_custom_call.1} parent=11 // pred_region
          _
        $region16: #{tpu_custom_call.1} parent=11 // pred_fallthru
          _
        // Predicated region
        $region17: #{tpu_custom_call.1} parent=11 // pred_check
          %p166 = pneg %p80
        $region18: #{tpu_custom_call.1} parent=11 // pred_check_branch
          %168 = sbr.rel (%p166) target = $region20
        $region19: #{tpu_custom_call.1} parent=11 // pred_region
          _
        $region20: #{tpu_custom_call.1} parent=11 // pred_fallthru
          _
        // Predicated region
        $region21: #{tpu_custom_call.1} parent=11 // pred_check
          %p169 = pneg %p101
        $region22: #{tpu_custom_call.1} parent=11 // pred_check_branch
          %171 = sbr.rel (%p169) target = $region24
        $region23: #{tpu_custom_call.1} parent=11 // pred_region
          _
        $region24: #{tpu_custom_call.1} parent=11 // pred_fallthru
          _
        // Predicated region
        $region25: #{tpu_custom_call.1} parent=11 // pred_check
          %p172 = pneg %p122
        $region26: #{tpu_custom_call.1} parent=11 // pred_check_branch
          %174 = sbr.rel (%p172) target = $region28
        $region27: #{tpu_custom_call.1} parent=11 // pred_region
          %s176 = ssub.s32 1024, 1024
          %177 = vsyncadd [#allocation3], %s176
          %s178 = sshll.u32 [#allocation2], 4
          %s179 = int_to_ptr.vmem [resolvable:$true] %s178
          %184 = dma.hbm_to_vmem [thread:$0]  %s4, 1024, %s179, [#allocation3], 64, 64, 4
        $region28: #{tpu_custom_call.1} parent=11 // pred_fallthru
          _
      $region12: #{tpu_custom_call.1} parent=5 // pred_fallthru
        _
      %p185 = scmp.lt.s32.totalorder %s12, 2
      // Predicated region
      $region29: #{tpu_custom_call.1} parent=5 // pred_check
        %p186 = pneg %p185
      $region30: #{tpu_custom_call.1} parent=5 // pred_check_branch
        %188 = sbr.rel (%p186) target = $region32
      $region31: #{tpu_custom_call.1} parent=5 // pred_region
        // Predicated region
        $region33: #{tpu_custom_call.1} parent=31 // pred_check
          %p189 = pneg %p32
        $region34: #{tpu_custom_call.1} parent=31 // pred_check_branch
          %191 = sbr.rel (%p189) target = $region36
        $region35: #{tpu_custom_call.1} parent=31 // pred_region
          %s192 = smul.u32 4, %s12
          %p193 = scmp.lt.s32.totalorder %s192, 7
          %s194 = scalar_select %p193, %s192, 7
          %s195 = smul.addr %s194, 8
          %s196 = scalar_lea.vmem %s0, %s195
          %s197 = smul.u32 4, %s12
        $region36: #{tpu_custom_call.1} parent=31 // pred_fallthru
          _
      $region32: #{tpu_custom_call.1} parent=5 // pred_fallthru
        _
      %p198 = scmp.le.s32.totalorder 1, %s12
      %p199 = scmp.lt.s32.totalorder %s12, 3
      %p200 = pnand %p198, %p199
      %p201 = pneg %p200
      // Predicated region
      $region37: #{tpu_custom_call.1} parent=5 // pred_check
        _
      $region38: #{tpu_custom_call.1} parent=5 // pred_check_branch
        %203 = sbr.rel (%p200) target = $region40
      $region39: #{tpu_custom_call.1} parent=5 // pred_region
        %s204 = ssub.s32 %s12, 1
        // Predicated region
        $region41: #{tpu_custom_call.1} parent=39 // pred_check
          %p205 = pneg %p122
        $region42: #{tpu_custom_call.1} parent=39 // pred_check_branch
          %207 = sbr.rel (%p205) target = $region44
        $region43: #{tpu_custom_call.1} parent=39 // pred_region
          %208 = dma.done [#allocation3], 1024
        $region44: #{tpu_custom_call.1} parent=39 // pred_fallthru
          _
        %s209 = smul.u32 4, %s17
        %p210 = scmp.lt.s32.totalorder %s209, 7
        %s211 = scalar_select %p210, %s209, 7
        %s212 = smul.addr %s211, 8
        %s213 = scalar_lea.vmem %s0, %s212
        %p214 = pneg %p38
        %p215 = pneg %p35
        %p216 = pneg %p59
        %p217 = pneg %p56
        %p218 = pneg %p80
        %p219 = pneg %p77
        %p220 = pneg %p101
        %p221 = pneg %p98
        %p222 = pneg %p122
        %p223 = pneg %p119
        %p224 = pneg %p148
        %p225 = pneg %p145
        %s226 = smul.u32 4, %s17
        %p227 = scmp.lt.s32.totalorder %s226, 7
        %s228 = scalar_select %p227, %s226, 7
        %s229 = smul.addr %s228, 8
        %s230 = scalar_lea.vmem %s5, %s229
        %s231 = smul.u32 4, %s17
        %p232 = scmp.lt.s32.totalorder %s231, 7
        %s233 = scalar_select %p232, %s231, 7
        %s234 = smul.addr %s233, 8
        %s235 = scalar_lea.vmem %s0, %s234
        %s236 = smul.u32 4, %s17
        %s237 = smul.u32 4, %s17
        %p238 = scmp.lt.s32.totalorder %s237, 7
        %s239 = scalar_select %p238, %s237, 7
        %s240 = smul.addr %s239, 8
        %s241 = scalar_lea.vmem %s5, %s240
        %s242 = smul.u32 4, %s17
        %v244 = vld [vmem:[%s1] sm:$0x1]
        %v245 = vld [vmem:[%s235] sm:$0xff]
        %v246 = vld [vmem:[%s235 + $0x8] sm:$0xff]
        %v247 = vld [vmem:[%s235 + $0x10] sm:$0xff]
        %v248 = vld [vmem:[%s235 + $0x18] sm:$0xff]
        %v249 = vld [vmem:[%s2] sm:$0x3]
        %v250 = vunpack.c.l.bf16 %v249
        %252 = vset.pattern.permute.xlu0 0
        %253 = vperm.xlu0 %252, %v245
        %v254 = vpop.permute.xlu0 %253
        %257 = vset.pattern.permute.xlu0 0
        %258 = vperm.xlu0 %257, %v246
        %v259 = vpop.permute.xlu0 %258
        %262 = vset.pattern.permute.xlu0 0
        %263 = vperm.xlu0 %262, %v247
        %v264 = vpop.permute.xlu0 %263
        %267 = vset.pattern.permute.xlu0 0
        %268 = vperm.xlu0 %267, %v248
        %v269 = vpop.permute.xlu0 %268
        %v271 = vlaneseq
        %v272 = vshrl.u32 %v271, 7
        %v273 = vsub.s32 0, %v272
        %v274 = vrot.slane %v250, %v273
        %v275 = vmul.f32 %v254, %v274
        %v276 = vmul.f32 %v259, %v274
        %v277 = vmul.f32 %v264, %v274
        %v278 = vmul.f32 %v269, %v274
        %279 = vset.pattern.permute.xlu0 1
        %280 = vperm.xlu0 %279, %v245
        %v281 = vpop.permute.xlu0 %280
        %283 = vset.pattern.permute.xlu0 1
        %284 = vperm.xlu0 %283, %v246
        %v285 = vpop.permute.xlu0 %284
        %287 = vset.pattern.permute.xlu0 1
        %288 = vperm.xlu0 %287, %v247
        %v289 = vpop.permute.xlu0 %288
        %291 = vset.pattern.permute.xlu0 1
        %292 = vperm.xlu0 %291, %v248
        %v293 = vpop.permute.xlu0 %292
        %v295 = vlaneseq
        %v296 = vshrl.u32 %v295, 7
        %v297 = vsub.s32 1, %v296
        %v298 = vrot.slane %v250, %v297
        %v299 = vmul.f32 %v281, %v298
        %v300 = vmul.f32 %v285, %v298
        %v301 = vmul.f32 %v289, %v298
        %v302 = vmul.f32 %v293, %v298
        %v303 = vadd.f32 %v275, %v299
        %v304 = vadd.f32 %v276, %v300
        %v305 = vadd.f32 %v277, %v301
        %v306 = vadd.f32 %v278, %v302
        %307 = vset.pattern.permute.xlu0 2
        %308 = vperm.xlu0 %307, %v245
        %v309 = vpop.permute.xlu0 %308
        %311 = vset.pattern.permute.xlu0 2
        %312 = vperm.xlu0 %311, %v246
        %v313 = vpop.permute.xlu0 %312
        %315 = vset.pattern.permute.xlu0 2
        %316 = vperm.xlu0 %315, %v247
        %v317 = vpop.permute.xlu0 %316
        %319 = vset.pattern.permute.xlu0 2
        %320 = vperm.xlu0 %319, %v248
        %v321 = vpop.permute.xlu0 %320
        %v323 = vlaneseq
        %v324 = vshrl.u32 %v323, 7
        %v325 = vsub.s32 2, %v324
        %v326 = vrot.slane %v250, %v325
        %v327 = vmul.f32 %v309, %v326
        %v328 = vmul.f32 %v313, %v326
        %v329 = vmul.f32 %v317, %v326
        %v330 = vmul.f32 %v321, %v326
        %v331 = vadd.f32 %v303, %v327
        %v332 = vadd.f32 %v304, %v328
        %v333 = vadd.f32 %v305, %v329
        %v334 = vadd.f32 %v306, %v330
        %335 = vset.pattern.permute.xlu0 3
        %336 = vperm.xlu0 %335, %v245
        %v337 = vpop.permute.xlu0 %336
        %339 = vset.pattern.permute.xlu0 3
        %340 = vperm.xlu0 %339, %v246
        %v341 = vpop.permute.xlu0 %340
        %343 = vset.pattern.permute.xlu0 3
        %344 = vperm.xlu0 %343, %v247
        %v345 = vpop.permute.xlu0 %344
        %347 = vset.pattern.permute.xlu0 3
        %348 = vperm.xlu0 %347, %v248
        %v349 = vpop.permute.xlu0 %348
        %v351 = vlaneseq
        %v352 = vshrl.u32 %v351, 7
        %v353 = vsub.s32 3, %v352
        %v354 = vrot.slane %v250, %v353
        %v355 = vmul.f32 %v337, %v354
        %v356 = vmul.f32 %v341, %v354
        %v357 = vmul.f32 %v345, %v354
        %v358 = vmul.f32 %v349, %v354
        %v359 = vadd.f32 %v331, %v355
        %v360 = vadd.f32 %v332, %v356
        %v361 = vadd.f32 %v333, %v357
        %v362 = vadd.f32 %v334, %v358
        %v363 = vlaneseq
        %v364 = vshrl.u32 %v363, 7
        %v365 = vsub.s32 0, %v364
        %v366 = vrot.slane %v244, %v365
        %v367 = vadd.f32 %v359, %v366
        %v368 = vadd.f32 %v360, %v366
        %v369 = vadd.f32 %v361, %v366
        %v370 = vadd.f32 %v362, %v366
        %v371 = vmax.f32 %v367, 0.0
        %v372 = vmax.f32 %v368, 0.0
        %v373 = vmax.f32 %v369, 0.0
        %v374 = vmax.f32 %v370, 0.0
        %v375 = vld [vmem:[%s1 + $0x1] sm:$0x1]
        %v376 = vpack.c.bf16 %v372, %v371
        %v377 = vpack.c.bf16 %v374, %v373
        %v378 = vld [vmem:[%s3] sm:$0xf]
        %v379 = vld [vmem:[%s3 + $0x4] sm:$0xf]
        %v380 = vld [vmem:[%s3 + $0x8] sm:$0xf]
        %v381 = vld [vmem:[%s3 + $0xc] sm:$0xf]
        %v382 = vld [vmem:[%s3 + $0x10] sm:$0xf]
        %v383 = vld [vmem:[%s3 + $0x14] sm:$0xf]
        %v384 = vld [vmem:[%s3 + $0x18] sm:$0xf]
        %v385 = vld [vmem:[%s3 + $0x1c] sm:$0xf]
        %v386 = vld [vmem:[%s3 + $0x20] sm:$0xf]
        %v387 = vld [vmem:[%s3 + $0x24] sm:$0xf]
        %v388 = vld [vmem:[%s3 + $0x28] sm:$0xf]
        %v389 = vld [vmem:[%s3 + $0x2c] sm:$0xf]
        %v390 = vld [vmem:[%s3 + $0x30] sm:$0xf]
        %v391 = vld [vmem:[%s3 + $0x34] sm:$0xf]
        %v392 = vld [vmem:[%s3 + $0x38] sm:$0xf]
        %v393 = vld [vmem:[%s3 + $0x3c] sm:$0xf]
        %v394 = vlaneseq
        %v395 = vshrl.u32 %v394, 7
        %v396 = vsub.s32 0, %v395
        %v397 = vrot.slane %v375, %v396
        %v414 = vunpack.c.l.b16 %v378
        %v415 = vunpack.c.l.b16 %v379
        %v416 = vunpack.c.l.b16 %v380
        %v417 = vunpack.c.l.b16 %v381
        %v418 = vunpack.c.l.b16 %v382
        %v419 = vunpack.c.l.b16 %v383
        %v420 = vunpack.c.l.b16 %v384
        %v421 = vunpack.c.l.b16 %v385
        %v422 = vunpack.c.l.b16 %v386
        %v423 = vunpack.c.l.b16 %v387
        %v424 = vunpack.c.l.b16 %v388
        %v425 = vunpack.c.l.b16 %v389
        %v426 = vunpack.c.l.b16 %v390
        %v427 = vunpack.c.l.b16 %v391
        %v428 = vunpack.c.l.b16 %v392
        %v429 = vunpack.c.l.b16 %v393
        %v430 = vpack.c.b16 %v415, %v414
        %v431 = vpack.c.b16 %v417, %v416
        %v432 = vpack.c.b16 %v419, %v418
        %v433 = vpack.c.b16 %v421, %v420
        %v434 = vpack.c.b16 %v423, %v422
        %v435 = vpack.c.b16 %v425, %v424
        %v436 = vpack.c.b16 %v427, %v426
        %v437 = vpack.c.b16 %v429, %v428
        %446 = vmatprep.subr.bf16.mxu0 0
        %447 = vmatpush1.bf16.msra.mxu0 %v430
        %448 = vmatprep.subr.bf16.mxu0 0
        %449 = vmatpush1.bf16.msra.mxu0 %v431
        %450 = vmatprep.subr.bf16.mxu0 0
        %451 = vmatpush1.bf16.msra.mxu0 %v432
        %452 = vmatprep.subr.bf16.mxu0 0
        %453 = vmatpush1.bf16.msra.mxu0 %v433
        %454 = vmatprep.subr.bf16.mxu0 0
        %455 = vmatpush1.bf16.msra.mxu0 %v434
        %456 = vmatprep.subr.bf16.mxu0 0
        %457 = vmatpush1.bf16.msra.mxu0 %v435
        %458 = vmatprep.subr.bf16.mxu0 0
        %459 = vmatpush1.bf16.msra.mxu0 %v436
        %460 = vmatprep.subr.bf16.mxu0 0
        %461 = vmatpush1.bf16.msra.mxu0 %v437
        %462 = vmatprep.subr.bf16.mxu0 0
        %463 = vmatpush1.bf16.msra.mxu0 0
        %464 = vmatprep.subr.bf16.mxu0 0
        %465 = vmatpush1.bf16.msra.mxu0 0
        %466 = vmatprep.subr.bf16.mxu0 0
        %467 = vmatpush1.bf16.msra.mxu0 0
        %468 = vmatprep.subr.bf16.mxu0 0
        %469 = vmatpush1.bf16.msra.mxu0 0
        %470 = vmatprep.subr.bf16.mxu0 0
        %471 = vmatpush1.bf16.msra.mxu0 0
        %472 = vmatprep.subr.bf16.mxu0 0
        %473 = vmatpush1.bf16.msra.mxu0 0
        %474 = vmatprep.subr.bf16.mxu0 0
        %475 = vmatpush1.bf16.msra.mxu0 0
        %476 = vmatprep.subr.bf16.mxu0 0
        %477 = vmatpush1.bf16.msra.mxu0 0
        %478 = vmatprep.mubr.bf16.mxu0 0
        %479 = vmatmul.mubr.bf16.gmra.mrb[0].mxu0 %v376
        %v480 = vpop.f32.mrb[0].mxu0
        %v481 = vadd.f32 %v397, %v480
        %v482 = vpop.f32.mrb[0].mxu0
        %v483 = vpop.f32.mrb[0].mxu0
        %v484 = vadd.f32 %v397, %v483
        %v485 = vpop.f32.mrb[0].mxu0
        %486 = vmatprep.mubr.bf16.mxu0 0
        %487 = vmatmul.mubr.bf16.gmra.mrb[0].mxu0 %v377
        %v488 = vpop.f32.mrb[0].mxu0
        %v489 = vadd.f32 %v397, %v488
        %v490 = vpop.f32.mrb[0].mxu0
        %v491 = vpop.f32.mrb[0].mxu0
        %v492 = vadd.f32 %v397, %v491
        %v493 = vpop.f32.mrb[0].mxu0
        %494 = vdwg.mxu0
        %v495 = vmax.f32 %v481, 0.0
        %v496 = vmax.f32 %v484, 0.0
        %v497 = vmax.f32 %v489, 0.0
        %v498 = vmax.f32 %v492, 0.0
        %v499 = vld [vmem:[%s1 + $0x2] sm:$0x1]
        %v500 = vpack.c.bf16 %v496, %v495
        %v501 = vpack.c.bf16 %v498, %v497
        %v502 = vld [vmem:[#allocation2] sm:$0xf]
        %v503 = vld [vmem:[#allocation2 + $0x4] sm:$0xf]
        %v504 = vld [vmem:[#allocation2 + $0x8] sm:$0xf]
        %v505 = vld [vmem:[#allocation2 + $0xc] sm:$0xf]
        %v506 = vld [vmem:[#allocation2 + $0x10] sm:$0xf]
        %v507 = vld [vmem:[#allocation2 + $0x14] sm:$0xf]
        %v508 = vld [vmem:[#allocation2 + $0x18] sm:$0xf]
        %v509 = vld [vmem:[#allocation2 + $0x1c] sm:$0xf]
        %v510 = vld [vmem:[#allocation2 + $0x20] sm:$0xf]
        %v511 = vld [vmem:[#allocation2 + $0x24] sm:$0xf]
        %v512 = vld [vmem:[#allocation2 + $0x28] sm:$0xf]
        %v513 = vld [vmem:[#allocation2 + $0x2c] sm:$0xf]
        %v514 = vld [vmem:[#allocation2 + $0x30] sm:$0xf]
        %v515 = vld [vmem:[#allocation2 + $0x34] sm:$0xf]
        %v516 = vld [vmem:[#allocation2 + $0x38] sm:$0xf]
        %v517 = vld [vmem:[#allocation2 + $0x3c] sm:$0xf]
        %v518 = vlaneseq
        %v519 = vshrl.u32 %v518, 7
        %v520 = vsub.s32 0, %v519
        %v521 = vrot.slane %v499, %v520
        %v538 = vunpack.c.l.b16 %v502
        %v539 = vunpack.c.l.b16 %v503
        %v540 = vunpack.c.l.b16 %v504
        %v541 = vunpack.c.l.b16 %v505
        %v542 = vunpack.c.l.b16 %v506
        %v543 = vunpack.c.l.b16 %v507
        %v544 = vunpack.c.l.b16 %v508
        %v545 = vunpack.c.l.b16 %v509
        %v546 = vunpack.c.l.b16 %v510
        %v547 = vunpack.c.l.b16 %v511
        %v548 = vunpack.c.l.b16 %v512
        %v549 = vunpack.c.l.b16 %v513
        %v550 = vunpack.c.l.b16 %v514
        %v551 = vunpack.c.l.b16 %v515
        %v552 = vunpack.c.l.b16 %v516
        %v553 = vunpack.c.l.b16 %v517
        %v554 = vpack.c.b16 %v539, %v538
        %v555 = vpack.c.b16 %v541, %v540
        %v556 = vpack.c.b16 %v543, %v542
        %v557 = vpack.c.b16 %v545, %v544
        %v558 = vpack.c.b16 %v547, %v546
        %v559 = vpack.c.b16 %v549, %v548
        %v560 = vpack.c.b16 %v551, %v550
        %v561 = vpack.c.b16 %v553, %v552
        %570 = vmatprep.subr.bf16.mxu0 0
        %571 = vmatpush1.bf16.msra.mxu0 %v554
        %572 = vmatprep.subr.bf16.mxu0 0
        %573 = vmatpush1.bf16.msra.mxu0 %v555
        %574 = vmatprep.subr.bf16.mxu0 0
        %575 = vmatpush1.bf16.msra.mxu0 %v556
        %576 = vmatprep.subr.bf16.mxu0 0
        %577 = vmatpush1.bf16.msra.mxu0 %v557
        %578 = vmatprep.subr.bf16.mxu0 0
        %579 = vmatpush1.bf16.msra.mxu0 %v558
        %580 = vmatprep.subr.bf16.mxu0 0
        %581 = vmatpush1.bf16.msra.mxu0 %v559
        %582 = vmatprep.subr.bf16.mxu0 0
        %583 = vmatpush1.bf16.msra.mxu0 %v560
        %584 = vmatprep.subr.bf16.mxu0 0
        %585 = vmatpush1.bf16.msra.mxu0 %v561
        %586 = vmatprep.subr.bf16.mxu0 0
        %587 = vmatpush1.bf16.msra.mxu0 0
        %588 = vmatprep.subr.bf16.mxu0 0
        %589 = vmatpush1.bf16.msra.mxu0 0
        %590 = vmatprep.subr.bf16.mxu0 0
        %591 = vmatpush1.bf16.msra.mxu0 0
        %592 = vmatprep.subr.bf16.mxu0 0
        %593 = vmatpush1.bf16.msra.mxu0 0
        %594 = vmatprep.subr.bf16.mxu0 0
        %595 = vmatpush1.bf16.msra.mxu0 0
        %596 = vmatprep.subr.bf16.mxu0 0
        %597 = vmatpush1.bf16.msra.mxu0 0
        %598 = vmatprep.subr.bf16.mxu0 0
        %599 = vmatpush1.bf16.msra.mxu0 0
        %600 = vmatprep.subr.bf16.mxu0 0
        %601 = vmatpush1.bf16.msra.mxu0 0
        %602 = vmatprep.mubr.bf16.mxu0 0
        %603 = vmatmul.mubr.bf16.gmra.mrb[0].mxu0 %v500
        %v604 = vpop.f32.mrb[0].mxu0
        %v605 = vadd.f32 %v521, %v604
        %v606 = vpop.f32.mrb[0].mxu0
        %v607 = vpop.f32.mrb[0].mxu0
        %v608 = vadd.f32 %v521, %v607
        %v609 = vpop.f32.mrb[0].mxu0
        %610 = vmatprep.mubr.bf16.mxu0 0
        %611 = vmatmul.mubr.bf16.gmra.mrb[0].mxu0 %v501
        %v612 = vpop.f32.mrb[0].mxu0
        %v613 = vadd.f32 %v521, %v612
        %v614 = vpop.f32.mrb[0].mxu0
        %v615 = vpop.f32.mrb[0].mxu0
        %v616 = vadd.f32 %v521, %v615
        %v617 = vpop.f32.mrb[0].mxu0
        %618 = vdwg.mxu0
        %vm619 = vcmask 15360
        %620 = vst.msk [vmem:[%s241] sm:$0xff] %vm619, %v605
        %621 = vst.msk [vmem:[%s241 + $0x8] sm:$0xff] %vm619, %v608
        %622 = vst.msk [vmem:[%s241 + $0x10] sm:$0xff] %vm619, %v613
        %623 = vst.msk [vmem:[%s241 + $0x18] sm:$0xff] %vm619, %v616
        %s624 = smul.u32 4, %s17
        %p625 = scmp.lt.s32.totalorder %s624, 7
        %s626 = scalar_select %p625, %s624, 7
        %s627 = smul.addr %s626, 8
        %s628 = scalar_lea.vmem %s5, %s627
        // Predicated region
        $region45: #{tpu_custom_call.1} parent=39 // pred_check
          %p629 = pneg %p145
        $region46: #{tpu_custom_call.1} parent=39 // pred_check_branch
          %631 = sbr.rel (%p629) target = $region48
        $region47: #{tpu_custom_call.1} parent=39 // pred_region
          %s632 = smul.u32 4, %s17
        $region48: #{tpu_custom_call.1} parent=39 // pred_fallthru
          _
      $region40: #{tpu_custom_call.1} parent=5 // pred_fallthru
        _
      %p633 = scmp.le.s32.totalorder 2, %s12
      // Predicated region
      $region49: #{tpu_custom_call.1} parent=5 // pred_check
        %p634 = pneg %p633
      $region50: #{tpu_custom_call.1} parent=5 // pred_check_branch
        %636 = sbr.rel (%p634) target = $region52
      $region51: #{tpu_custom_call.1} parent=5 // pred_region
        %s637 = ssub.s32 %s12, 2
        // Predicated region
        $region53: #{tpu_custom_call.1} parent=51 // pred_check
          %p638 = pneg %p151
        $region54: #{tpu_custom_call.1} parent=51 // pred_check_branch
          %640 = sbr.rel (%p638) target = $region56
        $region55: #{tpu_custom_call.1} parent=51 // pred_region
          %s641 = smul.u32 4, %s18
          %p642 = scmp.lt.s32.totalorder %s641, 7
          %s643 = scalar_select %p642, %s641, 7
          %s644 = smul.addr %s643, 8
          %s645 = scalar_lea.vmem %s5, %s644
        $region56: #{tpu_custom_call.1} parent=51 // pred_fallthru
          _
      $region52: #{tpu_custom_call.1} parent=5 // pred_fallthru
        _
    $region6: #{tpu_custom_call.1} parent=1 // loop_footer
      %s16 = sadd.s32 1, %s12
    $region7: #{tpu_custom_call.1} parent=1 // loop_footer_branch
      %11 = sbr.rel target = $region3
    $region8: #{tpu_custom_call.1} parent=1 // loop_exit
      _
    %646 = vsyncpa [#allocation3], 1
    %s647 = scalar_lea.sflag [#allocation3], 1
    %648 = vsyncpa %s647, 1

</llo_original>
